<compile_context>
chip_gen: v7x
topology: tpu7x:2x2x1
jax: 0.10.0
libtpu: 0.0.40
codegen_flags: <defaults>
</compile_context>

<pallas_src>
import functools
import numpy as np

import jax
import jax.numpy as jnp
from jax.experimental import pallas as pl
from jax.experimental.pallas import tpu as pltpu


def gru_kernel(x_ref, w_in_ref, w_hid_ref, b_ref, o_ref,
               *, seq_len, batch_pad, n_units):
    """Whole GRU recurrence in one kernel invocation.

    x_ref:     (S*B_pad, n_inputs)  time-major flattened (batch-padded) inputs
    w_in_ref:  (n_inputs, 3H)       stacked input weights  [reset | update | hidden]
    w_hid_ref: (H, 3H)              stacked hidden weights [reset | update | hidden]
    b_ref:     (1, 3H)              stacked biases
    o_ref:     (B_pad, H)           final hidden state (padded rows are zero)
    """
    H = n_units
    B = batch_pad

    # Phase 1 (off the serial chain): one fused input projection over all
    # S*B_pad rows — equivalent to `inp @ W_in_stacked + b_stacked`.
    proj = jnp.dot(x_ref[...], w_in_ref[...],
                   preferred_element_type=jnp.float32) + b_ref[...]   # (S*B, 3H)

    w_hid = w_hid_ref[...]                                            # (H, 3H)

    # Phase 2: serial recurrence, fully unrolled (seq_len is static and small).
    # Hidden state stays in vregs; single VMEM store at the very end.
    hid = jnp.zeros((B, H), jnp.float32)                              # hid_init = Constant(0)
    for t in range(seq_len):
        inp = proj[t * B:(t + 1) * B, :]                              # sublane-aligned slice

        # One MXU pass per step for all three gates (3H = 96 lanes).
        hid_input = jnp.dot(hid, w_hid, preferred_element_type=jnp.float32)  # (B, 3H)

        resetgate = jax.nn.sigmoid(hid_input[:, 0 * H:1 * H] + inp[:, 0 * H:1 * H])
        updategate = jax.nn.sigmoid(hid_input[:, 1 * H:2 * H] + inp[:, 1 * H:2 * H])
        hidden_update = jnp.tanh(inp[:, 2 * H:3 * H]
                                 + resetgate * hid_input[:, 2 * H:3 * H])

        # (1 - u) * hid + u * h_t  ==  hid + u * (h_t - hid)   (one fewer vmul)
        hid = hid + updategate * (hidden_update - hid)

    o_ref[...] = hid.astype(o_ref.dtype)


def gru_forward(x, w_in_stacked, w_hid_stacked, b_stacked, n_units):
    """x: (batch, seq, *features). Returns final hidden state (batch, n_units)."""
    B, S = x.shape[0], x.shape[1]
    n_inputs = int(np.prod(x.shape[2:]))
    H = n_units
    assert S >= 1, "GRU requires at least one timestep"

    # Pad batch up to the sublane granule (8) so per-step slices are whole
    # sublane groups inside the kernel. Padded rows are zero and stay zero.
    B_pad = ((B + 7) // 8) * 8

    # Tiny XLA-side layout prep (flatten features, time-major, pad batch, fold
    # seq*batch into rows); all compute happens inside the kernel.
    x_sbd = (x.reshape(B, S, n_inputs)
              .transpose(1, 0, 2)
              .astype(jnp.float32))                     # (S, B, n_in)
    if B_pad != B:
        x_sbd = jnp.pad(x_sbd, ((0, 0), (0, B_pad - B), (0, 0)))
    x2d = x_sbd.reshape(S * B_pad, n_inputs)

    w_in = w_in_stacked.astype(jnp.float32)             # (n_in, 3H)
    w_hid = w_hid_stacked.astype(jnp.float32)           # (H, 3H)
    b = b_stacked.astype(jnp.float32).reshape(1, 3 * H)  # (1, 3H)

    kernel = functools.partial(gru_kernel, seq_len=S, batch_pad=B_pad, n_units=H)

    def full_block(shape):
        # Full-array block (satisfies the (8,128) rule by equalling full dims).
        return pl.BlockSpec(shape, lambda i, _s=shape: tuple(0 for _ in _s))

    out_padded = pl.pallas_call(
        kernel,
        out_shape=jax.ShapeDtypeStruct((B_pad, H), jnp.float32),
        grid_spec=pltpu.PrefetchScalarGridSpec(
            num_scalar_prefetch=0,
            grid=(1,),   # single invocation; the recurrence lives inside the kernel
            in_specs=[
                full_block((S * B_pad, n_inputs)),
                full_block((n_inputs, 3 * H)),
                full_block((H, 3 * H)),
                full_block((1, 3 * H)),
            ],
            out_specs=full_block((B_pad, H)),
        ),
        compiler_params=pltpu.CompilerParams(
            dimension_semantics=("arbitrary",),
            vmem_limit_bytes=32 * 1024 * 1024,   # explicit budget; fits every chip
        ),
    )(x2d, w_in, w_hid, b)

    return out_padded[:B]


def gru_reference(x, w_in_stacked, w_hid_stacked, b_stacked, n_units):
    """Pure-JAX reference mirroring the torch semantics (lax.scan)."""
    B, S = x.shape[0], x.shape[1]
    n_inputs = int(np.prod(x.shape[2:]))
    H = n_units
    x_sbd = x.reshape(B, S, n_inputs).transpose(1, 0, 2).astype(jnp.float32)
    inp_proj = x_sbd @ w_in_stacked + b_stacked  # (S, B, 3H)

    def step(hid_prev, inp_n):
        hid_input = hid_prev @ w_hid_stacked
        r = jax.nn.sigmoid(hid_input[:, 0 * H:1 * H] + inp_n[:, 0 * H:1 * H])
        u = jax.nn.sigmoid(hid_input[:, 1 * H:2 * H] + inp_n[:, 1 * H:2 * H])
        h_t = jnp.tanh(inp_n[:, 2 * H:3 * H] + r * hid_input[:, 2 * H:3 * H])
        hid = (1.0 - u) * hid_prev + u * h_t
        return hid, None

    hid0 = jnp.zeros((B, H), jnp.float32)
    hid_final, _ = jax.lax.scan(step, hid0, inp_proj)
    return hid_final


if __name__ == "__main__":
    # Shapes consistent with the module:
    # input_shape = (batch, seq, 4, 4) -> n_inputs = 16, n_units = 32.
    batch, seq, h_sp, w_sp = 4, 8, 4, 4
    n_inputs = h_sp * w_sp
    n_units = 32

    key = jax.random.PRNGKey(0)
    kx, kr_in, ku_in, kh_in, kr_hid, ku_hid, kh_hid = jax.random.split(key, 7)

    x = jax.random.normal(kx, (batch, seq, h_sp, w_sp), dtype=jnp.float32)

    # Gate(W_in=Normal(std=0.1), W_hid=Normal(std=0.1), b=Constant(0))
    std = 0.1
    W_in_to_resetgate = std * jax.random.normal(kr_in, (n_inputs, n_units), jnp.float32)
    W_in_to_updategate = std * jax.random.normal(ku_in, (n_inputs, n_units), jnp.float32)
    W_in_to_hidden_update = std * jax.random.normal(kh_in, (n_inputs, n_units), jnp.float32)
    W_hid_to_resetgate = std * jax.random.normal(kr_hid, (n_units, n_units), jnp.float32)
    W_hid_to_updategate = std * jax.random.normal(ku_hid, (n_units, n_units), jnp.float32)
    W_hid_to_hidden_update = std * jax.random.normal(kh_hid, (n_units, n_units), jnp.float32)
    b_resetgate = jnp.zeros((n_units,), jnp.float32)
    b_updategate = jnp.zeros((n_units,), jnp.float32)
    b_hidden_update = jnp.zeros((n_units,), jnp.float32)

    # Stacking order in the torch forward: [resetgate, updategate, hidden_update]
    W_in_stacked = jnp.concatenate(
        [W_in_to_resetgate, W_in_to_updategate, W_in_to_hidden_update], axis=1)
    W_hid_stacked = jnp.concatenate(
        [W_hid_to_resetgate, W_hid_to_updategate, W_hid_to_hidden_update], axis=1)
    b_stacked = jnp.concatenate(
        [b_resetgate, b_updategate, b_hidden_update], axis=0)

    out = gru_forward(x, W_in_stacked, W_hid_stacked, b_stacked, n_units)
    out = jax.block_until_ready(out)

    ref = gru_reference(x, W_in_stacked, W_hid_stacked, b_stacked, n_units)
    np.testing.assert_allclose(np.asarray(out), np.asarray(ref), rtol=1e-5, atol=1e-5)
    assert out.shape == (batch, n_units)

    print("KERNEL_OK")
</pallas_src>

<mosaic_0001>
module attributes {stable_mosaic.version = 11 : i64} {
  func.func @gru_kernel(%arg0: i32, %arg1: memref<64x16xf32, #tpu.memory_space<vmem>>, %arg2: memref<16x96xf32, #tpu.memory_space<vmem>>, %arg3: memref<32x96xf32, #tpu.memory_space<vmem>>, %arg4: memref<1x96xf32, #tpu.memory_space<vmem>>, %arg5: memref<8x32xf32, #tpu.memory_space<vmem>>) attributes {dimension_semantics = [#tpu.dimension_semantics<arbitrary>], iteration_bounds = array<i64: 1>, scalar_prefetch = 0 : i64, scratch_operands = 0 : i64, tpu.core_type = #tpu.core_type<tc>, window_params = [{pipeline_mode = #tpu.pipeline_mode<synchronous>, transform_indices = @transform_0, window_bounds = array<i64: 64, 16>}, {pipeline_mode = #tpu.pipeline_mode<synchronous>, transform_indices = @transform_1, window_bounds = array<i64: 16, 96>}, {pipeline_mode = #tpu.pipeline_mode<synchronous>, transform_indices = @transform_2, window_bounds = array<i64: 32, 96>}, {pipeline_mode = #tpu.pipeline_mode<synchronous>, transform_indices = @transform_3, window_bounds = array<i64: 1, 96>}, {pipeline_mode = #tpu.pipeline_mode<synchronous>, transform_indices = @transform_4, window_bounds = array<i64: 8, 32>}]} {
    %c0 = arith.constant 0 : index
    %c0_0 = arith.constant 0 : index
    %0 = vector.load %arg1[%c0, %c0_0] : memref<64x16xf32, #tpu.memory_space<vmem>>, vector<64x16xf32>
    %c0_1 = arith.constant 0 : index
    %c0_2 = arith.constant 0 : index
    %1 = vector.load %arg2[%c0_1, %c0_2] : memref<16x96xf32, #tpu.memory_space<vmem>>, vector<16x96xf32>
    %cst = arith.constant dense<0.000000e+00> : vector<64x96xf32>
    %2 = tpu.matmul %0, %1, %cst {dimension_numbers = #tpu.dot_dimension_numbers<[1], [0], [0], [1], [0, 0, 1, 1], [], []>} : vector<64x16xf32>, vector<16x96xf32>, vector<64x96xf32> -> vector<64x96xf32>
    %c0_3 = arith.constant 0 : index
    %c0_4 = arith.constant 0 : index
    %3 = vector.load %arg4[%c0_3, %c0_4] : memref<1x96xf32, #tpu.memory_space<vmem>>, vector<1x96xf32>
    %4 = vector.broadcast %3 : vector<1x96xf32> to vector<64x96xf32>
    %5 = arith.addf %2, %4 : vector<64x96xf32>
    %c0_5 = arith.constant 0 : index
    %c0_6 = arith.constant 0 : index
    %6 = vector.load %arg3[%c0_5, %c0_6] : memref<32x96xf32, #tpu.memory_space<vmem>>, vector<32x96xf32>
    %cst_7 = arith.constant 0.000000e+00 : f32
    %7 = vector.broadcast %cst_7 : f32 to vector<8x32xf32>
    %8 = vector.extract_strided_slice %5 {offsets = [0, 0], sizes = [8, 96], strides = [1, 1]} : vector<64x96xf32> to vector<8x96xf32>
    %cst_8 = arith.constant dense<0.000000e+00> : vector<8x96xf32>
    %9 = tpu.matmul %7, %6, %cst_8 {dimension_numbers = #tpu.dot_dimension_numbers<[1], [0], [0], [1], [0, 0, 1, 1], [], []>} : vector<8x32xf32>, vector<32x96xf32>, vector<8x96xf32> -> vector<8x96xf32>
    %10 = vector.extract_strided_slice %9 {offsets = [0, 0], sizes = [8, 32], strides = [1, 1]} : vector<8x96xf32> to vector<8x32xf32>
    %11 = vector.extract_strided_slice %8 {offsets = [0, 0], sizes = [8, 32], strides = [1, 1]} : vector<8x96xf32> to vector<8x32xf32>
    %12 = arith.addf %10, %11 : vector<8x32xf32>
    %13 = arith.negf %12 : vector<8x32xf32>
    %14 = math.exp %13 : vector<8x32xf32>
    %cst_9 = arith.constant 1.000000e+00 : f32
    %15 = vector.broadcast %cst_9 : f32 to vector<8x32xf32>
    %16 = arith.addf %15, %14 : vector<8x32xf32>
    %17 = arith.divf %15, %16 : vector<8x32xf32>
    %18 = vector.extract_strided_slice %9 {offsets = [0, 32], sizes = [8, 32], strides = [1, 1]} : vector<8x96xf32> to vector<8x32xf32>
    %19 = vector.extract_strided_slice %8 {offsets = [0, 32], sizes = [8, 32], strides = [1, 1]} : vector<8x96xf32> to vector<8x32xf32>
    %20 = arith.addf %18, %19 : vector<8x32xf32>
    %21 = arith.negf %20 : vector<8x32xf32>
    %22 = math.exp %21 : vector<8x32xf32>
    %cst_10 = arith.constant 1.000000e+00 : f32
    %23 = vector.broadcast %cst_10 : f32 to vector<8x32xf32>
    %24 = arith.addf %23, %22 : vector<8x32xf32>
    %25 = arith.divf %23, %24 : vector<8x32xf32>
    %26 = vector.extract_strided_slice %8 {offsets = [0, 64], sizes = [8, 32], strides = [1, 1]} : vector<8x96xf32> to vector<8x32xf32>
    %27 = vector.extract_strided_slice %9 {offsets = [0, 64], sizes = [8, 32], strides = [1, 1]} : vector<8x96xf32> to vector<8x32xf32>
    %28 = arith.mulf %17, %27 : vector<8x32xf32>
    %29 = arith.addf %26, %28 : vector<8x32xf32>
    %30 = math.tanh %29 : vector<8x32xf32>
    %31 = arith.subf %30, %7 : vector<8x32xf32>
    %32 = arith.mulf %25, %31 : vector<8x32xf32>
    %33 = arith.addf %7, %32 : vector<8x32xf32>
    %34 = vector.extract_strided_slice %5 {offsets = [8, 0], sizes = [8, 96], strides = [1, 1]} : vector<64x96xf32> to vector<8x96xf32>
    %cst_11 = arith.constant dense<0.000000e+00> : vector<8x96xf32>
    %35 = tpu.matmul %33, %6, %cst_11 {dimension_numbers = #tpu.dot_dimension_numbers<[1], [0], [0], [1], [0, 0, 1, 1], [], []>} : vector<8x32xf32>, vector<32x96xf32>, vector<8x96xf32> -> vector<8x96xf32>
    %36 = vector.extract_strided_slice %35 {offsets = [0, 0], sizes = [8, 32], strides = [1, 1]} : vector<8x96xf32> to vector<8x32xf32>
    %37 = vector.extract_strided_slice %34 {offsets = [0, 0], sizes = [8, 32], strides = [1, 1]} : vector<8x96xf32> to vector<8x32xf32>
    %38 = arith.addf %36, %37 : vector<8x32xf32>
    %39 = arith.negf %38 : vector<8x32xf32>
    %40 = math.exp %39 : vector<8x32xf32>
    %cst_12 = arith.constant 1.000000e+00 : f32
    %41 = vector.broadcast %cst_12 : f32 to vector<8x32xf32>
    %42 = arith.addf %41, %40 : vector<8x32xf32>
    %43 = arith.divf %41, %42 : vector<8x32xf32>
    %44 = vector.extract_strided_slice %35 {offsets = [0, 32], sizes = [8, 32], strides = [1, 1]} : vector<8x96xf32> to vector<8x32xf32>
    %45 = vector.extract_strided_slice %34 {offsets = [0, 32], sizes = [8, 32], strides = [1, 1]} : vector<8x96xf32> to vector<8x32xf32>
    %46 = arith.addf %44, %45 : vector<8x32xf32>
    %47 = arith.negf %46 : vector<8x32xf32>
    %48 = math.exp %47 : vector<8x32xf32>
    %cst_13 = arith.constant 1.000000e+00 : f32
    %49 = vector.broadcast %cst_13 : f32 to vector<8x32xf32>
    %50 = arith.addf %49, %48 : vector<8x32xf32>
    %51 = arith.divf %49, %50 : vector<8x32xf32>
    %52 = vector.extract_strided_slice %34 {offsets = [0, 64], sizes = [8, 32], strides = [1, 1]} : vector<8x96xf32> to vector<8x32xf32>
    %53 = vector.extract_strided_slice %35 {offsets = [0, 64], sizes = [8, 32], strides = [1, 1]} : vector<8x96xf32> to vector<8x32xf32>
    %54 = arith.mulf %43, %53 : vector<8x32xf32>
    %55 = arith.addf %52, %54 : vector<8x32xf32>
    %56 = math.tanh %55 : vector<8x32xf32>
    %57 = arith.subf %56, %33 : vector<8x32xf32>
    %58 = arith.mulf %51, %57 : vector<8x32xf32>
    %59 = arith.addf %33, %58 : vector<8x32xf32>
    %60 = vector.extract_strided_slice %5 {offsets = [16, 0], sizes = [8, 96], strides = [1, 1]} : vector<64x96xf32> to vector<8x96xf32>
    %cst_14 = arith.constant dense<0.000000e+00> : vector<8x96xf32>
    %61 = tpu.matmul %59, %6, %cst_14 {dimension_numbers = #tpu.dot_dimension_numbers<[1], [0], [0], [1], [0, 0, 1, 1], [], []>} : vector<8x32xf32>, vector<32x96xf32>, vector<8x96xf32> -> vector<8x96xf32>
    %62 = vector.extract_strided_slice %61 {offsets = [0, 0], sizes = [8, 32], strides = [1, 1]} : vector<8x96xf32> to vector<8x32xf32>
    %63 = vector.extract_strided_slice %60 {offsets = [0, 0], sizes = [8, 32], strides = [1, 1]} : vector<8x96xf32> to vector<8x32xf32>
    %64 = arith.addf %62, %63 : vector<8x32xf32>
    %65 = arith.negf %64 : vector<8x32xf32>
    %66 = math.exp %65 : vector<8x32xf32>
    %cst_15 = arith.constant 1.000000e+00 : f32
    %67 = vector.broadcast %cst_15 : f32 to vector<8x32xf32>
    %68 = arith.addf %67, %66 : vector<8x32xf32>
    %69 = arith.divf %67, %68 : vector<8x32xf32>
    %70 = vector.extract_strided_slice %61 {offsets = [0, 32], sizes = [8, 32], strides = [1, 1]} : vector<8x96xf32> to vector<8x32xf32>
    %71 = vector.extract_strided_slice %60 {offsets = [0, 32], sizes = [8, 32], strides = [1, 1]} : vector<8x96xf32> to vector<8x32xf32>
    %72 = arith.addf %70, %71 : vector<8x32xf32>
    %73 = arith.negf %72 : vector<8x32xf32>
    %74 = math.exp %73 : vector<8x32xf32>
    %cst_16 = arith.constant 1.000000e+00 : f32
    %75 = vector.broadcast %cst_16 : f32 to vector<8x32xf32>
    %76 = arith.addf %75, %74 : vector<8x32xf32>
    %77 = arith.divf %75, %76 : vector<8x32xf32>
    %78 = vector.extract_strided_slice %60 {offsets = [0, 64], sizes = [8, 32], strides = [1, 1]} : vector<8x96xf32> to vector<8x32xf32>
    %79 = vector.extract_strided_slice %61 {offsets = [0, 64], sizes = [8, 32], strides = [1, 1]} : vector<8x96xf32> to vector<8x32xf32>
    %80 = arith.mulf %69, %79 : vector<8x32xf32>
    %81 = arith.addf %78, %80 : vector<8x32xf32>
    %82 = math.tanh %81 : vector<8x32xf32>
    %83 = arith.subf %82, %59 : vector<8x32xf32>
    %84 = arith.mulf %77, %83 : vector<8x32xf32>
    %85 = arith.addf %59, %84 : vector<8x32xf32>
    %86 = vector.extract_strided_slice %5 {offsets = [24, 0], sizes = [8, 96], strides = [1, 1]} : vector<64x96xf32> to vector<8x96xf32>
    %cst_17 = arith.constant dense<0.000000e+00> : vector<8x96xf32>
    %87 = tpu.matmul %85, %6, %cst_17 {dimension_numbers = #tpu.dot_dimension_numbers<[1], [0], [0], [1], [0, 0, 1, 1], [], []>} : vector<8x32xf32>, vector<32x96xf32>, vector<8x96xf32> -> vector<8x96xf32>
    %88 = vector.extract_strided_slice %87 {offsets = [0, 0], sizes = [8, 32], strides = [1, 1]} : vector<8x96xf32> to vector<8x32xf32>
    %89 = vector.extract_strided_slice %86 {offsets = [0, 0], sizes = [8, 32], strides = [1, 1]} : vector<8x96xf32> to vector<8x32xf32>
    %90 = arith.addf %88, %89 : vector<8x32xf32>
    %91 = arith.negf %90 : vector<8x32xf32>
    %92 = math.exp %91 : vector<8x32xf32>
    %cst_18 = arith.constant 1.000000e+00 : f32
    %93 = vector.broadcast %cst_18 : f32 to vector<8x32xf32>
    %94 = arith.addf %93, %92 : vector<8x32xf32>
    %95 = arith.divf %93, %94 : vector<8x32xf32>
    %96 = vector.extract_strided_slice %87 {offsets = [0, 32], sizes = [8, 32], strides = [1, 1]} : vector<8x96xf32> to vector<8x32xf32>
    %97 = vector.extract_strided_slice %86 {offsets = [0, 32], sizes = [8, 32], strides = [1, 1]} : vector<8x96xf32> to vector<8x32xf32>
    %98 = arith.addf %96, %97 : vector<8x32xf32>
    %99 = arith.negf %98 : vector<8x32xf32>
    %100 = math.exp %99 : vector<8x32xf32>
    %cst_19 = arith.constant 1.000000e+00 : f32
    %101 = vector.broadcast %cst_19 : f32 to vector<8x32xf32>
    %102 = arith.addf %101, %100 : vector<8x32xf32>
    %103 = arith.divf %101, %102 : vector<8x32xf32>
    %104 = vector.extract_strided_slice %86 {offsets = [0, 64], sizes = [8, 32], strides = [1, 1]} : vector<8x96xf32> to vector<8x32xf32>
    %105 = vector.extract_strided_slice %87 {offsets = [0, 64], sizes = [8, 32], strides = [1, 1]} : vector<8x96xf32> to vector<8x32xf32>
    %106 = arith.mulf %95, %105 : vector<8x32xf32>
    %107 = arith.addf %104, %106 : vector<8x32xf32>
    %108 = math.tanh %107 : vector<8x32xf32>
    %109 = arith.subf %108, %85 : vector<8x32xf32>
    %110 = arith.mulf %103, %109 : vector<8x32xf32>
    %111 = arith.addf %85, %110 : vector<8x32xf32>
    %112 = vector.extract_strided_slice %5 {offsets = [32, 0], sizes = [8, 96], strides = [1, 1]} : vector<64x96xf32> to vector<8x96xf32>
    %cst_20 = arith.constant dense<0.000000e+00> : vector<8x96xf32>
    %113 = tpu.matmul %111, %6, %cst_20 {dimension_numbers = #tpu.dot_dimension_numbers<[1], [0], [0], [1], [0, 0, 1, 1], [], []>} : vector<8x32xf32>, vector<32x96xf32>, vector<8x96xf32> -> vector<8x96xf32>
    %114 = vector.extract_strided_slice %113 {offsets = [0, 0], sizes = [8, 32], strides = [1, 1]} : vector<8x96xf32> to vector<8x32xf32>
    %115 = vector.extract_strided_slice %112 {offsets = [0, 0], sizes = [8, 32], strides = [1, 1]} : vector<8x96xf32> to vector<8x32xf32>
    %116 = arith.addf %114, %115 : vector<8x32xf32>
    %117 = arith.negf %116 : vector<8x32xf32>
    %118 = math.exp %117 : vector<8x32xf32>
    %cst_21 = arith.constant 1.000000e+00 : f32
    %119 = vector.broadcast %cst_21 : f32 to vector<8x32xf32>
    %120 = arith.addf %119, %118 : vector<8x32xf32>
    %121 = arith.divf %119, %120 : vector<8x32xf32>
    %122 = vector.extract_strided_slice %113 {offsets = [0, 32], sizes = [8, 32], strides = [1, 1]} : vector<8x96xf32> to vector<8x32xf32>
    %123 = vector.extract_strided_slice %112 {offsets = [0, 32], sizes = [8, 32], strides = [1, 1]} : vector<8x96xf32> to vector<8x32xf32>
    %124 = arith.addf %122, %123 : vector<8x32xf32>
    %125 = arith.negf %124 : vector<8x32xf32>
    %126 = math.exp %125 : vector<8x32xf32>
    %cst_22 = arith.constant 1.000000e+00 : f32
    %127 = vector.broadcast %cst_22 : f32 to vector<8x32xf32>
    %128 = arith.addf %127, %126 : vector<8x32xf32>
    %129 = arith.divf %127, %128 : vector<8x32xf32>
    %130 = vector.extract_strided_slice %112 {offsets = [0, 64], sizes = [8, 32], strides = [1, 1]} : vector<8x96xf32> to vector<8x32xf32>
    %131 = vector.extract_strided_slice %113 {offsets = [0, 64], sizes = [8, 32], strides = [1, 1]} : vector<8x96xf32> to vector<8x32xf32>
    %132 = arith.mulf %121, %131 : vector<8x32xf32>
    %133 = arith.addf %130, %132 : vector<8x32xf32>
    %134 = math.tanh %133 : vector<8x32xf32>
    %135 = arith.subf %134, %111 : vector<8x32xf32>
    %136 = arith.mulf %129, %135 : vector<8x32xf32>
    %137 = arith.addf %111, %136 : vector<8x32xf32>
    %138 = vector.extract_strided_slice %5 {offsets = [40, 0], sizes = [8, 96], strides = [1, 1]} : vector<64x96xf32> to vector<8x96xf32>
    %cst_23 = arith.constant dense<0.000000e+00> : vector<8x96xf32>
    %139 = tpu.matmul %137, %6, %cst_23 {dimension_numbers = #tpu.dot_dimension_numbers<[1], [0], [0], [1], [0, 0, 1, 1], [], []>} : vector<8x32xf32>, vector<32x96xf32>, vector<8x96xf32> -> vector<8x96xf32>
    %140 = vector.extract_strided_slice %139 {offsets = [0, 0], sizes = [8, 32], strides = [1, 1]} : vector<8x96xf32> to vector<8x32xf32>
    %141 = vector.extract_strided_slice %138 {offsets = [0, 0], sizes = [8, 32], strides = [1, 1]} : vector<8x96xf32> to vector<8x32xf32>
    %142 = arith.addf %140, %141 : vector<8x32xf32>
    %143 = arith.negf %142 : vector<8x32xf32>
    %144 = math.exp %143 : vector<8x32xf32>
    %cst_24 = arith.constant 1.000000e+00 : f32
    %145 = vector.broadcast %cst_24 : f32 to vector<8x32xf32>
    %146 = arith.addf %145, %144 : vector<8x32xf32>
    %147 = arith.divf %145, %146 : vector<8x32xf32>
    %148 = vector.extract_strided_slice %139 {offsets = [0, 32], sizes = [8, 32], strides = [1, 1]} : vector<8x96xf32> to vector<8x32xf32>
    %149 = vector.extract_strided_slice %138 {offsets = [0, 32], sizes = [8, 32], strides = [1, 1]} : vector<8x96xf32> to vector<8x32xf32>
    %150 = arith.addf %148, %149 : vector<8x32xf32>
    %151 = arith.negf %150 : vector<8x32xf32>
    %152 = math.exp %151 : vector<8x32xf32>
    %cst_25 = arith.constant 1.000000e+00 : f32
    %153 = vector.broadcast %cst_25 : f32 to vector<8x32xf32>
    %154 = arith.addf %153, %152 : vector<8x32xf32>
    %155 = arith.divf %153, %154 : vector<8x32xf32>
    %156 = vector.extract_strided_slice %138 {offsets = [0, 64], sizes = [8, 32], strides = [1, 1]} : vector<8x96xf32> to vector<8x32xf32>
    %157 = vector.extract_strided_slice %139 {offsets = [0, 64], sizes = [8, 32], strides = [1, 1]} : vector<8x96xf32> to vector<8x32xf32>
    %158 = arith.mulf %147, %157 : vector<8x32xf32>
    %159 = arith.addf %156, %158 : vector<8x32xf32>
    %160 = math.tanh %159 : vector<8x32xf32>
    %161 = arith.subf %160, %137 : vector<8x32xf32>
    %162 = arith.mulf %155, %161 : vector<8x32xf32>
    %163 = arith.addf %137, %162 : vector<8x32xf32>
    %164 = vector.extract_strided_slice %5 {offsets = [48, 0], sizes = [8, 96], strides = [1, 1]} : vector<64x96xf32> to vector<8x96xf32>
    %cst_26 = arith.constant dense<0.000000e+00> : vector<8x96xf32>
    %165 = tpu.matmul %163, %6, %cst_26 {dimension_numbers = #tpu.dot_dimension_numbers<[1], [0], [0], [1], [0, 0, 1, 1], [], []>} : vector<8x32xf32>, vector<32x96xf32>, vector<8x96xf32> -> vector<8x96xf32>
    %166 = vector.extract_strided_slice %165 {offsets = [0, 0], sizes = [8, 32], strides = [1, 1]} : vector<8x96xf32> to vector<8x32xf32>
    %167 = vector.extract_strided_slice %164 {offsets = [0, 0], sizes = [8, 32], strides = [1, 1]} : vector<8x96xf32> to vector<8x32xf32>
    %168 = arith.addf %166, %167 : vector<8x32xf32>
    %169 = arith.negf %168 : vector<8x32xf32>
    %170 = math.exp %169 : vector<8x32xf32>
    %cst_27 = arith.constant 1.000000e+00 : f32
    %171 = vector.broadcast %cst_27 : f32 to vector<8x32xf32>
    %172 = arith.addf %171, %170 : vector<8x32xf32>
    %173 = arith.divf %171, %172 : vector<8x32xf32>
    %174 = vector.extract_strided_slice %165 {offsets = [0, 32], sizes = [8, 32], strides = [1, 1]} : vector<8x96xf32> to vector<8x32xf32>
    %175 = vector.extract_strided_slice %164 {offsets = [0, 32], sizes = [8, 32], strides = [1, 1]} : vector<8x96xf32> to vector<8x32xf32>
    %176 = arith.addf %174, %175 : vector<8x32xf32>
    %177 = arith.negf %176 : vector<8x32xf32>
    %178 = math.exp %177 : vector<8x32xf32>
    %cst_28 = arith.constant 1.000000e+00 : f32
    %179 = vector.broadcast %cst_28 : f32 to vector<8x32xf32>
    %180 = arith.addf %179, %178 : vector<8x32xf32>
    %181 = arith.divf %179, %180 : vector<8x32xf32>
    %182 = vector.extract_strided_slice %164 {offsets = [0, 64], sizes = [8, 32], strides = [1, 1]} : vector<8x96xf32> to vector<8x32xf32>
    %183 = vector.extract_strided_slice %165 {offsets = [0, 64], sizes = [8, 32], strides = [1, 1]} : vector<8x96xf32> to vector<8x32xf32>
    %184 = arith.mulf %173, %183 : vector<8x32xf32>
    %185 = arith.addf %182, %184 : vector<8x32xf32>
    %186 = math.tanh %185 : vector<8x32xf32>
    %187 = arith.subf %186, %163 : vector<8x32xf32>
    %188 = arith.mulf %181, %187 : vector<8x32xf32>
    %189 = arith.addf %163, %188 : vector<8x32xf32>
    %190 = vector.extract_strided_slice %5 {offsets = [56, 0], sizes = [8, 96], strides = [1, 1]} : vector<64x96xf32> to vector<8x96xf32>
    %cst_29 = arith.constant dense<0.000000e+00> : vector<8x96xf32>
    %191 = tpu.matmul %189, %6, %cst_29 {dimension_numbers = #tpu.dot_dimension_numbers<[1], [0], [0], [1], [0, 0, 1, 1], [], []>} : vector<8x32xf32>, vector<32x96xf32>, vector<8x96xf32> -> vector<8x96xf32>
    %192 = vector.extract_strided_slice %191 {offsets = [0, 0], sizes = [8, 32], strides = [1, 1]} : vector<8x96xf32> to vector<8x32xf32>
    %193 = vector.extract_strided_slice %190 {offsets = [0, 0], sizes = [8, 32], strides = [1, 1]} : vector<8x96xf32> to vector<8x32xf32>
    %194 = arith.addf %192, %193 : vector<8x32xf32>
    %195 = arith.negf %194 : vector<8x32xf32>
    %196 = math.exp %195 : vector<8x32xf32>
    %cst_30 = arith.constant 1.000000e+00 : f32
    %197 = vector.broadcast %cst_30 : f32 to vector<8x32xf32>
    %198 = arith.addf %197, %196 : vector<8x32xf32>
    %199 = arith.divf %197, %198 : vector<8x32xf32>
    %200 = vector.extract_strided_slice %191 {offsets = [0, 32], sizes = [8, 32], strides = [1, 1]} : vector<8x96xf32> to vector<8x32xf32>
    %201 = vector.extract_strided_slice %190 {offsets = [0, 32], sizes = [8, 32], strides = [1, 1]} : vector<8x96xf32> to vector<8x32xf32>
    %202 = arith.addf %200, %201 : vector<8x32xf32>
    %203 = arith.negf %202 : vector<8x32xf32>
    %204 = math.exp %203 : vector<8x32xf32>
    %cst_31 = arith.constant 1.000000e+00 : f32
    %205 = vector.broadcast %cst_31 : f32 to vector<8x32xf32>
    %206 = arith.addf %205, %204 : vector<8x32xf32>
    %207 = arith.divf %205, %206 : vector<8x32xf32>
    %208 = vector.extract_strided_slice %190 {offsets = [0, 64], sizes = [8, 32], strides = [1, 1]} : vector<8x96xf32> to vector<8x32xf32>
    %209 = vector.extract_strided_slice %191 {offsets = [0, 64], sizes = [8, 32], strides = [1, 1]} : vector<8x96xf32> to vector<8x32xf32>
    %210 = arith.mulf %199, %209 : vector<8x32xf32>
    %211 = arith.addf %208, %210 : vector<8x32xf32>
    %212 = math.tanh %211 : vector<8x32xf32>
    %213 = arith.subf %212, %189 : vector<8x32xf32>
    %214 = arith.mulf %207, %213 : vector<8x32xf32>
    %215 = arith.addf %189, %214 : vector<8x32xf32>
    %c0_32 = arith.constant 0 : index
    %c0_33 = arith.constant 0 : index
    %216 = vector.load %arg5[%c0_32, %c0_33] : memref<8x32xf32, #tpu.memory_space<vmem>>, vector<8x32xf32>
    tpu.vector_store %arg5[%c0_32, %c0_33], %215 {strides = array<i32>} : memref<8x32xf32, #tpu.memory_space<vmem>>, vector<8x32xf32>,
    return
  }
  func.func @transform_0(%arg0: i32) -> (i32, i32) {
    %c0_i32 = arith.constant 0 : i32
    %c0_i32_0 = arith.constant 0 : i32
    %c0_i32_1 = arith.constant 0 : i32
    return %c0_i32, %c0_i32_0 : i32, i32
  }
  func.func @transform_1(%arg0: i32) -> (i32, i32) {
    %c0_i32 = arith.constant 0 : i32
    %c0_i32_0 = arith.constant 0 : i32
    %c0_i32_1 = arith.constant 0 : i32
    return %c0_i32, %c0_i32_0 : i32, i32
  }
  func.func @transform_2(%arg0: i32) -> (i32, i32) {
    %c0_i32 = arith.constant 0 : i32
    %c0_i32_0 = arith.constant 0 : i32
    %c0_i32_1 = arith.constant 0 : i32
    return %c0_i32, %c0_i32_0 : i32, i32
  }
  func.func @transform_3(%arg0: i32) -> (i32, i32) {
    %c0_i32 = arith.constant 0 : i32
    %c0_i32_0 = arith.constant 0 : i32
    %c0_i32_1 = arith.constant 0 : i32
    return %c0_i32, %c0_i32_0 : i32, i32
  }
  func.func @transform_4(%arg0: i32) -> (i32, i32) {
    %c0_i32 = arith.constant 0 : i32
    %c0_i32_0 = arith.constant 0 : i32
    %c0_i32_1 = arith.constant 0 : i32
    return %c0_i32, %c0_i32_0 : i32, i32
  }
}

</mosaic_0001>

<llo_original>
// kernel: tpu_custom_call.1
$region0: #{tpu_custom_call.1}
  #allocation0 [shape = 'u32[]', space=smem, size = 0x4, offset = 0x4, fixed_abs, tag = 'smem constant byte address 0x4 - core index']
  #allocation1 [shape = 'u32[144,128]{1,0:T(1,128)}', space=vmem, size = 0x12000, scoped, tag = 'internal scratch']
  %s0 = inlined_call_operand.vmem [shape: f32[64,16], index: 0, kind: input, shape index: {}]
  %s1 = inlined_call_operand.vmem [shape: f32[16,96], index: 1, kind: input, shape index: {}]
  %s2 = inlined_call_operand.vmem [shape: f32[32,96], index: 2, kind: input, shape index: {}]
  %s3 = inlined_call_operand.vmem [shape: f32[1,96], index: 3, kind: input, shape index: {}]
  %s4 = inlined_call_operand.hbm [shape: f32[8,32], index: 4, kind: output, shape index: {}]
  %s5 = sld [smem:[#allocation0]]
  $region26: #{tpu_custom_call.1} parent=0
    _
  %s7 = ssub.s32 1, %s5
  %s8 = scalar_select 0, %s7, %s5
  $region1: #{tpu_custom_call.1} parent=0
    #allocation2 [shape = 'u8[4096]{0}', space=vmem, size = 0x1000, scoped, tag = 'output window, operand 0, single buffered']
    #allocation3 [shape = 's32[1]{0}', space=sflag, size = 0x4, scoped, tag = 'scoped memory for tpu_custom_call.1']
    %9 = vsyncpa [#allocation3], 0
    // Predicated region
    $region2: #{tpu_custom_call.1} parent=1 // pred_check
      _
    $region3: #{tpu_custom_call.1} parent=1 // pred_check_branch
      %11 = sbr.rel (0) target = $region5
    $region4: #{tpu_custom_call.1} parent=1 // pred_region
      _
    $region5: #{tpu_custom_call.1} parent=1 // pred_fallthru
      _
    // Predicated region
    $region6: #{tpu_custom_call.1} parent=1 // pred_check
      _
    $region7: #{tpu_custom_call.1} parent=1 // pred_check_branch
      %13 = sbr.rel (0) target = $region9
    $region8: #{tpu_custom_call.1} parent=1 // pred_region
      _
    $region9: #{tpu_custom_call.1} parent=1 // pred_fallthru
      _
    // Predicated region
    $region10: #{tpu_custom_call.1} parent=1 // pred_check
      _
    $region11: #{tpu_custom_call.1} parent=1 // pred_check_branch
      %15 = sbr.rel (0) target = $region13
    $region12: #{tpu_custom_call.1} parent=1 // pred_region
      _
    $region13: #{tpu_custom_call.1} parent=1 // pred_fallthru
      _
    // Predicated region
    $region14: #{tpu_custom_call.1} parent=1 // pred_check
      _
    $region15: #{tpu_custom_call.1} parent=1 // pred_check_branch
      %17 = sbr.rel (0) target = $region17
    $region16: #{tpu_custom_call.1} parent=1 // pred_region
      _
    $region17: #{tpu_custom_call.1} parent=1 // pred_fallthru
      _
    %v18 = vld [vmem:[%s0] sm:$0xff]
    %v19 = vld [vmem:[%s0 + $0x8] sm:$0xff]
    %v20 = vld [vmem:[%s0 + $0x10] sm:$0xff]
    %v21 = vld [vmem:[%s0 + $0x18] sm:$0xff]
    %v22 = vld [vmem:[%s0 + $0x20] sm:$0xff]
    %v23 = vld [vmem:[%s0 + $0x28] sm:$0xff]
    %v24 = vld [vmem:[%s0 + $0x30] sm:$0xff]
    %v25 = vld [vmem:[%s0 + $0x38] sm:$0xff]
    %v26 = vld [vmem:[%s1] sm:$0xff]
    %v27 = vld [vmem:[%s1 + $0x8] sm:$0xff]
    %v28 = vld [vmem:[%s3] sm:$0x1]
    %v30 = vlaneseq
    %v31 = vshrl.u32 %v30, 7
    %v32 = vsub.s32 0, %v31
    %v33 = vrot.slane %v28, %v32
    %vm35 = vcmask 130048
    %v37 = vsel %vm35, %v18, 0
    %v40 = vsel %vm35, %v19, 0
    %v43 = vsel %vm35, %v20, 0
    %v46 = vsel %vm35, %v21, 0
    %v49 = vsel %vm35, %v22, 0
    %v52 = vsel %vm35, %v23, 0
    %v55 = vsel %vm35, %v24, 0
    %v58 = vsel %vm35, %v25, 0
    %60 = vmatprep.subr.mxu0 0.0
    %61 = vmatpush1.msra.mxu0 %v26
    %62 = vmatprep.subr.mxu0 0.0
    %63 = vmatpush1.msra.mxu0 %v27
    %64 = vmatprep.subr.mxu0 0.0
    %65 = vmatpush1.msra.mxu0 0.0
    %66 = vmatprep.subr.mxu0 0.0
    %67 = vmatpush1.msra.mxu0 0.0
    %68 = vmatprep.subr.mxu0 0.0
    %69 = vmatpush1.msra.mxu0 0.0
    %70 = vmatprep.subr.mxu0 0.0
    %71 = vmatpush1.msra.mxu0 0.0
    %72 = vmatprep.subr.mxu0 0.0
    %73 = vmatpush1.msra.mxu0 0.0
    %74 = vmatprep.subr.mxu0 0.0
    %75 = vmatpush1.msra.mxu0 0.0
    %76 = vmatprep.subr.mxu0 0.0
    %77 = vmatpush1.msra.mxu0 0.0
    %78 = vmatprep.subr.mxu0 0.0
    %79 = vmatpush1.msra.mxu0 0.0
    %80 = vmatprep.subr.mxu0 0.0
    %81 = vmatpush1.msra.mxu0 0.0
    %82 = vmatprep.subr.mxu0 0.0
    %83 = vmatpush1.msra.mxu0 0.0
    %84 = vmatprep.subr.mxu0 0.0
    %85 = vmatpush1.msra.mxu0 0.0
    %86 = vmatprep.subr.mxu0 0.0
    %87 = vmatpush1.msra.mxu0 0.0
    %88 = vmatprep.subr.mxu0 0.0
    %89 = vmatpush1.msra.mxu0 0.0
    %90 = vmatprep.subr.mxu0 0.0
    %91 = vmatpush1.msra.mxu0 0.0
    %92 = vmatprep.subr.mxu0 0.0
    %93 = vmatpush1.msra.mxu0 0.0
    %94 = vmatprep.subr.mxu0 0.0
    %95 = vmatpush1.msra.mxu0 0.0
    %96 = vmatprep.subr.mxu0 0.0
    %97 = vmatpush1.msra.mxu0 0.0
    %98 = vmatprep.subr.mxu0 0.0
    %99 = vmatpush1.msra.mxu0 0.0
    %100 = vmatprep.subr.mxu0 0.0
    %101 = vmatpush1.msra.mxu0 0.0
    %102 = vmatprep.subr.mxu0 0.0
    %103 = vmatpush1.msra.mxu0 0.0
    %104 = vmatprep.subr.mxu0 0.0
    %105 = vmatpush1.msra.mxu0 0.0
    %106 = vmatprep.subr.mxu0 0.0
    %107 = vmatpush1.msra.mxu0 0.0
    %108 = vmatprep.subr.mxu0 0.0
    %109 = vmatpush1.msra.mxu0 0.0
    %110 = vmatprep.subr.mxu0 0.0
    %111 = vmatpush1.msra.mxu0 0.0
    %112 = vmatprep.subr.mxu0 0.0
    %113 = vmatpush1.msra.mxu0 0.0
    %114 = vmatprep.subr.mxu0 0.0
    %115 = vmatpush1.msra.mxu0 0.0
    %116 = vmatprep.subr.mxu0 0.0
    %117 = vmatpush1.msra.mxu0 0.0
    %118 = vmatprep.subr.mxu0 0.0
    %119 = vmatpush1.msra.mxu0 0.0
    %120 = vmatprep.subr.mxu0 0.0
    %121 = vmatpush1.msra.mxu0 0.0
    %122 = vmatprep.subr.mxu0 0.0
    %123 = vmatpush1.msra.mxu0 0.0
    %124 = vmatprep.mubr.f32.mxu0 0.0
    %125 = vmatmul.mubr.f32.gmra.mrb[0].mxu0 %v37
    %v126 = vpop.f32.mrb[0].mxu0
    %v127 = vadd.f32 %v33, %v126
    %v128 = vpop.f32.mrb[0].mxu0
    %129 = vmatprep.mubr.f32.mxu0 0.0
    %130 = vmatmul.mubr.f32.gmra.mrb[0].mxu0 %v40
    %v131 = vpop.f32.mrb[0].mxu0
    %v132 = vadd.f32 %v33, %v131
    %v133 = vpop.f32.mrb[0].mxu0
    %134 = vmatprep.mubr.f32.mxu0 0.0
    %135 = vmatmul.mubr.f32.gmra.mrb[0].mxu0 %v43
    %v136 = vpop.f32.mrb[0].mxu0
    %v137 = vadd.f32 %v33, %v136
    %v138 = vpop.f32.mrb[0].mxu0
    %139 = vmatprep.mubr.f32.mxu0 0.0
    %140 = vmatmul.mubr.f32.gmra.mrb[0].mxu0 %v46
    %v141 = vpop.f32.mrb[0].mxu0
    %v142 = vadd.f32 %v33, %v141
    %v143 = vpop.f32.mrb[0].mxu0
    %144 = vmatprep.mubr.f32.mxu0 0.0
    %145 = vmatmul.mubr.f32.gmra.mrb[0].mxu0 %v49
    %v146 = vpop.f32.mrb[0].mxu0
    %v147 = vadd.f32 %v33, %v146
    %v148 = vpop.f32.mrb[0].mxu0
    %149 = vmatprep.mubr.f32.mxu0 0.0
    %150 = vmatmul.mubr.f32.gmra.mrb[0].mxu0 %v52
    %v151 = vpop.f32.mrb[0].mxu0
    %v152 = vadd.f32 %v33, %v151
    %v153 = vpop.f32.mrb[0].mxu0
    %154 = vmatprep.mubr.f32.mxu0 0.0
    %155 = vmatmul.mubr.f32.gmra.mrb[0].mxu0 %v55
    %v156 = vpop.f32.mrb[0].mxu0
    %v157 = vadd.f32 %v33, %v156
    %v158 = vpop.f32.mrb[0].mxu0
    %159 = vmatprep.mubr.f32.mxu0 0.0
    %160 = vmatmul.mubr.f32.gmra.mrb[0].mxu0 %v58
    %v161 = vpop.f32.mrb[0].mxu0
    %v162 = vadd.f32 %v33, %v161
    %v163 = vpop.f32.mrb[0].mxu0
    %164 = vdwg.mxu0
    %v165 = vld [vmem:[%s2] sm:$0xff]
    %v166 = vld [vmem:[%s2 + $0x8] sm:$0xff]
    %v167 = vld [vmem:[%s2 + $0x10] sm:$0xff]
    %v168 = vld [vmem:[%s2 + $0x18] sm:$0xff]
    %vm169 = vcmask 261120
    %v171 = vsel %vm169, 0.0, 0
    %173 = vmatprep.subr.mxu0 0.0
    %174 = vmatpush1.msra.mxu0 %v165
    %175 = vmatprep.subr.mxu0 0.0
    %176 = vmatpush1.msra.mxu0 %v166
    %177 = vmatprep.subr.mxu0 0.0
    %178 = vmatpush1.msra.mxu0 %v167
    %179 = vmatprep.subr.mxu0 0.0
    %180 = vmatpush1.msra.mxu0 %v168
    %181 = vmatprep.subr.mxu0 0.0
    %182 = vmatpush1.msra.mxu0 0.0
    %183 = vmatprep.subr.mxu0 0.0
    %184 = vmatpush1.msra.mxu0 0.0
    %185 = vmatprep.subr.mxu0 0.0
    %186 = vmatpush1.msra.mxu0 0.0
    %187 = vmatprep.subr.mxu0 0.0
    %188 = vmatpush1.msra.mxu0 0.0
    %189 = vmatprep.subr.mxu0 0.0
    %190 = vmatpush1.msra.mxu0 0.0
    %191 = vmatprep.subr.mxu0 0.0
    %192 = vmatpush1.msra.mxu0 0.0
    %193 = vmatprep.subr.mxu0 0.0
    %194 = vmatpush1.msra.mxu0 0.0
    %195 = vmatprep.subr.mxu0 0.0
    %196 = vmatpush1.msra.mxu0 0.0
    %197 = vmatprep.subr.mxu0 0.0
    %198 = vmatpush1.msra.mxu0 0.0
    %199 = vmatprep.subr.mxu0 0.0
    %200 = vmatpush1.msra.mxu0 0.0
    %201 = vmatprep.subr.mxu0 0.0
    %202 = vmatpush1.msra.mxu0 0.0
    %203 = vmatprep.subr.mxu0 0.0
    %204 = vmatpush1.msra.mxu0 0.0
    %205 = vmatprep.subr.mxu0 0.0
    %206 = vmatpush1.msra.mxu0 0.0
    %207 = vmatprep.subr.mxu0 0.0
    %208 = vmatpush1.msra.mxu0 0.0
    %209 = vmatprep.subr.mxu0 0.0
    %210 = vmatpush1.msra.mxu0 0.0
    %211 = vmatprep.subr.mxu0 0.0
    %212 = vmatpush1.msra.mxu0 0.0
    %213 = vmatprep.subr.mxu0 0.0
    %214 = vmatpush1.msra.mxu0 0.0
    %215 = vmatprep.subr.mxu0 0.0
    %216 = vmatpush1.msra.mxu0 0.0
    %217 = vmatprep.subr.mxu0 0.0
    %218 = vmatpush1.msra.mxu0 0.0
    %219 = vmatprep.subr.mxu0 0.0
    %220 = vmatpush1.msra.mxu0 0.0
    %221 = vmatprep.subr.mxu0 0.0
    %222 = vmatpush1.msra.mxu0 0.0
    %223 = vmatprep.subr.mxu0 0.0
    %224 = vmatpush1.msra.mxu0 0.0
    %225 = vmatprep.subr.mxu0 0.0
    %226 = vmatpush1.msra.mxu0 0.0
    %227 = vmatprep.subr.mxu0 0.0
    %228 = vmatpush1.msra.mxu0 0.0
    %229 = vmatprep.subr.mxu0 0.0
    %230 = vmatpush1.msra.mxu0 0.0
    %231 = vmatprep.subr.mxu0 0.0
    %232 = vmatpush1.msra.mxu0 0.0
    %233 = vmatprep.subr.mxu0 0.0
    %234 = vmatpush1.msra.mxu0 0.0
    %235 = vmatprep.subr.mxu0 0.0
    %236 = vmatpush1.msra.mxu0 0.0
    %237 = vmatprep.mubr.f32.mxu0 0.0
    %238 = vmatmul.mubr.f32.gmra.mrb[0].mxu0 %v171
    %v239 = vpop.f32.mrb[0].mxu0
    %v240 = vadd.f32 0.0, %v239
    %v241 = vpop.f32.mrb[0].mxu0
    %242 = vdwg.mxu0
    %v243 = vadd.f32 %v240, %v127
    %v244 = vxor.u32 %v243, 2147483648
    %v245 = vmul.f32 %v244, 1.442695
    %v246 = vpow.pop %v245
    %v247 = vadd.f32 %v246, 1.0
    %v248 = vrcp.pop %v247
    %v249 = vmul.f32 1.0, %v248
    %251 = vrot.lane.b32.xlu0 %v240, 64
    %v252 = vpop.permute.xlu0 %251
    %v254 = vmul.f32 %v249, %v252
    %256 = vrot.lane.b32.xlu0 %v254, 64
    %v257 = vpop.permute.xlu0 %256
    %v259 = vadd.f32 %v127, %v257
    %v260 = vtanh.pop %v259
    %262 = vrot.lane.b32.xlu0 %v260, 96
    %v263 = vpop.permute.xlu0 %262
    %v265 = vmul.f32 %v249, %v263
    %v266 = vadd.f32 %v265, 0.0
    %268 = vrot.lane.b32.xlu0 %v266, 96
    %v269 = vpop.permute.xlu0 %268
    %v270 = vsel %vm169, %v269, 0
    %272 = vmatprep.subr.mxu0 0.0
    %273 = vmatpush1.msra.mxu0 %v165
    %274 = vmatprep.subr.mxu0 0.0
    %275 = vmatpush1.msra.mxu0 %v166
    %276 = vmatprep.subr.mxu0 0.0
    %277 = vmatpush1.msra.mxu0 %v167
    %278 = vmatprep.subr.mxu0 0.0
    %279 = vmatpush1.msra.mxu0 %v168
    %280 = vmatprep.subr.mxu0 0.0
    %281 = vmatpush1.msra.mxu0 0.0
    %282 = vmatprep.subr.mxu0 0.0
    %283 = vmatpush1.msra.mxu0 0.0
    %284 = vmatprep.subr.mxu0 0.0
    %285 = vmatpush1.msra.mxu0 0.0
    %286 = vmatprep.subr.mxu0 0.0
    %287 = vmatpush1.msra.mxu0 0.0
    %288 = vmatprep.subr.mxu0 0.0
    %289 = vmatpush1.msra.mxu0 0.0
    %290 = vmatprep.subr.mxu0 0.0
    %291 = vmatpush1.msra.mxu0 0.0
    %292 = vmatprep.subr.mxu0 0.0
    %293 = vmatpush1.msra.mxu0 0.0
    %294 = vmatprep.subr.mxu0 0.0
    %295 = vmatpush1.msra.mxu0 0.0
    %296 = vmatprep.subr.mxu0 0.0
    %297 = vmatpush1.msra.mxu0 0.0
    %298 = vmatprep.subr.mxu0 0.0
    %299 = vmatpush1.msra.mxu0 0.0
    %300 = vmatprep.subr.mxu0 0.0
    %301 = vmatpush1.msra.mxu0 0.0
    %302 = vmatprep.subr.mxu0 0.0
    %303 = vmatpush1.msra.mxu0 0.0
    %304 = vmatprep.subr.mxu0 0.0
    %305 = vmatpush1.msra.mxu0 0.0
    %306 = vmatprep.subr.mxu0 0.0
    %307 = vmatpush1.msra.mxu0 0.0
    %308 = vmatprep.subr.mxu0 0.0
    %309 = vmatpush1.msra.mxu0 0.0
    %310 = vmatprep.subr.mxu0 0.0
    %311 = vmatpush1.msra.mxu0 0.0
    %312 = vmatprep.subr.mxu0 0.0
    %313 = vmatpush1.msra.mxu0 0.0
    %314 = vmatprep.subr.mxu0 0.0
    %315 = vmatpush1.msra.mxu0 0.0
    %316 = vmatprep.subr.mxu0 0.0
    %317 = vmatpush1.msra.mxu0 0.0
    %318 = vmatprep.subr.mxu0 0.0
    %319 = vmatpush1.msra.mxu0 0.0
    %320 = vmatprep.subr.mxu0 0.0
    %321 = vmatpush1.msra.mxu0 0.0
    %322 = vmatprep.subr.mxu0 0.0
    %323 = vmatpush1.msra.mxu0 0.0
    %324 = vmatprep.subr.mxu0 0.0
    %325 = vmatpush1.msra.mxu0 0.0
    %326 = vmatprep.subr.mxu0 0.0
    %327 = vmatpush1.msra.mxu0 0.0
    %328 = vmatprep.subr.mxu0 0.0
    %329 = vmatpush1.msra.mxu0 0.0
    %330 = vmatprep.subr.mxu0 0.0
    %331 = vmatpush1.msra.mxu0 0.0
    %332 = vmatprep.subr.mxu0 0.0
    %333 = vmatpush1.msra.mxu0 0.0
    %334 = vmatprep.subr.mxu0 0.0
    %335 = vmatpush1.msra.mxu0 0.0
    %336 = vmatprep.mubr.f32.mxu0 0.0
    %337 = vmatmul.mubr.f32.gmra.mrb[0].mxu0 %v270
    %v338 = vpop.f32.mrb[0].mxu0
    %v339 = vadd.f32 0.0, %v338
    %v340 = vpop.f32.mrb[0].mxu0
    %341 = vdwg.mxu0
    %v342 = vadd.f32 %v339, %v132
    %v343 = vxor.u32 %v342, 2147483648
    %v344 = vmul.f32 %v343, 1.442695
    %v345 = vpow.pop %v344
    %v346 = vadd.f32 %v345, 1.0
    %v347 = vrcp.pop %v346
    %v348 = vmul.f32 1.0, %v347
    %350 = vrot.lane.b32.xlu0 %v339, 64
    %v351 = vpop.permute.xlu0 %350
    %v353 = vmul.f32 %v348, %v351
    %355 = vrot.lane.b32.xlu0 %v353, 64
    %v356 = vpop.permute.xlu0 %355
    %v358 = vadd.f32 %v132, %v356
    %v359 = vtanh.pop %v358
    %360 = vrot.lane.b32.xlu0 %v266, 32
    %v361 = vpop.permute.xlu0 %360
    %v363 = vsub.f32 %v359, %v361
    %365 = vrot.lane.b32.xlu0 %v363, 96
    %v366 = vpop.permute.xlu0 %365
    %v368 = vmul.f32 %v348, %v366
    %v369 = vadd.f32 %v266, %v368
    %371 = vrot.lane.b32.xlu0 %v369, 96
    %v372 = vpop.permute.xlu0 %371
    %v373 = vsel %vm169, %v372, 0
    %375 = vmatprep.subr.mxu0 0.0
    %376 = vmatpush1.msra.mxu0 %v165
    %377 = vmatprep.subr.mxu0 0.0
    %378 = vmatpush1.msra.mxu0 %v166
    %379 = vmatprep.subr.mxu0 0.0
    %380 = vmatpush1.msra.mxu0 %v167
    %381 = vmatprep.subr.mxu0 0.0
    %382 = vmatpush1.msra.mxu0 %v168
    %383 = vmatprep.subr.mxu0 0.0
    %384 = vmatpush1.msra.mxu0 0.0
    %385 = vmatprep.subr.mxu0 0.0
    %386 = vmatpush1.msra.mxu0 0.0
    %387 = vmatprep.subr.mxu0 0.0
    %388 = vmatpush1.msra.mxu0 0.0
    %389 = vmatprep.subr.mxu0 0.0
    %390 = vmatpush1.msra.mxu0 0.0
    %391 = vmatprep.subr.mxu0 0.0
    %392 = vmatpush1.msra.mxu0 0.0
    %393 = vmatprep.subr.mxu0 0.0
    %394 = vmatpush1.msra.mxu0 0.0
    %395 = vmatprep.subr.mxu0 0.0
    %396 = vmatpush1.msra.mxu0 0.0
    %397 = vmatprep.subr.mxu0 0.0
    %398 = vmatpush1.msra.mxu0 0.0
    %399 = vmatprep.subr.mxu0 0.0
    %400 = vmatpush1.msra.mxu0 0.0
    %401 = vmatprep.subr.mxu0 0.0
    %402 = vmatpush1.msra.mxu0 0.0
    %403 = vmatprep.subr.mxu0 0.0
    %404 = vmatpush1.msra.mxu0 0.0
    %405 = vmatprep.subr.mxu0 0.0
    %406 = vmatpush1.msra.mxu0 0.0
    %407 = vmatprep.subr.mxu0 0.0
    %408 = vmatpush1.msra.mxu0 0.0
    %409 = vmatprep.subr.mxu0 0.0
    %410 = vmatpush1.msra.mxu0 0.0
    %411 = vmatprep.subr.mxu0 0.0
    %412 = vmatpush1.msra.mxu0 0.0
    %413 = vmatprep.subr.mxu0 0.0
    %414 = vmatpush1.msra.mxu0 0.0
    %415 = vmatprep.subr.mxu0 0.0
    %416 = vmatpush1.msra.mxu0 0.0
    %417 = vmatprep.subr.mxu0 0.0
    %418 = vmatpush1.msra.mxu0 0.0
    %419 = vmatprep.subr.mxu0 0.0
    %420 = vmatpush1.msra.mxu0 0.0
    %421 = vmatprep.subr.mxu0 0.0
    %422 = vmatpush1.msra.mxu0 0.0
    %423 = vmatprep.subr.mxu0 0.0
    %424 = vmatpush1.msra.mxu0 0.0
    %425 = vmatprep.subr.mxu0 0.0
    %426 = vmatpush1.msra.mxu0 0.0
    %427 = vmatprep.subr.mxu0 0.0
    %428 = vmatpush1.msra.mxu0 0.0
    %429 = vmatprep.subr.mxu0 0.0
    %430 = vmatpush1.msra.mxu0 0.0
    %431 = vmatprep.subr.mxu0 0.0
    %432 = vmatpush1.msra.mxu0 0.0
    %433 = vmatprep.subr.mxu0 0.0
    %434 = vmatpush1.msra.mxu0 0.0
    %435 = vmatprep.subr.mxu0 0.0
    %436 = vmatpush1.msra.mxu0 0.0
    %437 = vmatprep.subr.mxu0 0.0
    %438 = vmatpush1.msra.mxu0 0.0
    %439 = vmatprep.mubr.f32.mxu0 0.0
    %440 = vmatmul.mubr.f32.gmra.mrb[0].mxu0 %v373
    %v441 = vpop.f32.mrb[0].mxu0
    %v442 = vadd.f32 0.0, %v441
    %v443 = vpop.f32.mrb[0].mxu0
    %444 = vdwg.mxu0
    %v445 = vadd.f32 %v442, %v137
    %v446 = vxor.u32 %v445, 2147483648
    %v447 = vmul.f32 %v446, 1.442695
    %v448 = vpow.pop %v447
    %v449 = vadd.f32 %v448, 1.0
    %v450 = vrcp.pop %v449
    %v451 = vmul.f32 1.0, %v450
    %453 = vrot.lane.b32.xlu0 %v442, 64
    %v454 = vpop.permute.xlu0 %453
    %v456 = vmul.f32 %v451, %v454
    %458 = vrot.lane.b32.xlu0 %v456, 64
    %v459 = vpop.permute.xlu0 %458
    %v461 = vadd.f32 %v137, %v459
    %v462 = vtanh.pop %v461
    %463 = vrot.lane.b32.xlu0 %v369, 32
    %v464 = vpop.permute.xlu0 %463
    %v466 = vsub.f32 %v462, %v464
    %468 = vrot.lane.b32.xlu0 %v466, 96
    %v469 = vpop.permute.xlu0 %468
    %v471 = vmul.f32 %v451, %v469
    %v472 = vadd.f32 %v369, %v471
    %474 = vrot.lane.b32.xlu0 %v472, 96
    %v475 = vpop.permute.xlu0 %474
    %v476 = vsel %vm169, %v475, 0
    %478 = vmatprep.subr.mxu0 0.0
    %479 = vmatpush1.msra.mxu0 %v165
    %480 = vmatprep.subr.mxu0 0.0
    %481 = vmatpush1.msra.mxu0 %v166
    %482 = vmatprep.subr.mxu0 0.0
    %483 = vmatpush1.msra.mxu0 %v167
    %484 = vmatprep.subr.mxu0 0.0
    %485 = vmatpush1.msra.mxu0 %v168
    %486 = vmatprep.subr.mxu0 0.0
    %487 = vmatpush1.msra.mxu0 0.0
    %488 = vmatprep.subr.mxu0 0.0
    %489 = vmatpush1.msra.mxu0 0.0
    %490 = vmatprep.subr.mxu0 0.0
    %491 = vmatpush1.msra.mxu0 0.0
    %492 = vmatprep.subr.mxu0 0.0
    %493 = vmatpush1.msra.mxu0 0.0
    %494 = vmatprep.subr.mxu0 0.0
    %495 = vmatpush1.msra.mxu0 0.0
    %496 = vmatprep.subr.mxu0 0.0
    %497 = vmatpush1.msra.mxu0 0.0
    %498 = vmatprep.subr.mxu0 0.0
    %499 = vmatpush1.msra.mxu0 0.0
    %500 = vmatprep.subr.mxu0 0.0
    %501 = vmatpush1.msra.mxu0 0.0
    %502 = vmatprep.subr.mxu0 0.0
    %503 = vmatpush1.msra.mxu0 0.0
    %504 = vmatprep.subr.mxu0 0.0
    %505 = vmatpush1.msra.mxu0 0.0
    %506 = vmatprep.subr.mxu0 0.0
    %507 = vmatpush1.msra.mxu0 0.0
    %508 = vmatprep.subr.mxu0 0.0
    %509 = vmatpush1.msra.mxu0 0.0
    %510 = vmatprep.subr.mxu0 0.0
    %511 = vmatpush1.msra.mxu0 0.0
    %512 = vmatprep.subr.mxu0 0.0
    %513 = vmatpush1.msra.mxu0 0.0
    %514 = vmatprep.subr.mxu0 0.0
    %515 = vmatpush1.msra.mxu0 0.0
    %516 = vmatprep.subr.mxu0 0.0
    %517 = vmatpush1.msra.mxu0 0.0
    %518 = vmatprep.subr.mxu0 0.0
    %519 = vmatpush1.msra.mxu0 0.0
    %520 = vmatprep.subr.mxu0 0.0
    %521 = vmatpush1.msra.mxu0 0.0
    %522 = vmatprep.subr.mxu0 0.0
    %523 = vmatpush1.msra.mxu0 0.0
    %524 = vmatprep.subr.mxu0 0.0
    %525 = vmatpush1.msra.mxu0 0.0
    %526 = vmatprep.subr.mxu0 0.0
    %527 = vmatpush1.msra.mxu0 0.0
    %528 = vmatprep.subr.mxu0 0.0
    %529 = vmatpush1.msra.mxu0 0.0
    %530 = vmatprep.subr.mxu0 0.0
    %531 = vmatpush1.msra.mxu0 0.0
    %532 = vmatprep.subr.mxu0 0.0
    %533 = vmatpush1.msra.mxu0 0.0
    %534 = vmatprep.subr.mxu0 0.0
    %535 = vmatpush1.msra.mxu0 0.0
    %536 = vmatprep.subr.mxu0 0.0
    %537 = vmatpush1.msra.mxu0 0.0
    %538 = vmatprep.subr.mxu0 0.0
    %539 = vmatpush1.msra.mxu0 0.0
    %540 = vmatprep.subr.mxu0 0.0
    %541 = vmatpush1.msra.mxu0 0.0
    %542 = vmatprep.mubr.f32.mxu0 0.0
    %543 = vmatmul.mubr.f32.gmra.mrb[0].mxu0 %v476
    %v544 = vpop.f32.mrb[0].mxu0
    %v545 = vadd.f32 0.0, %v544
    %v546 = vpop.f32.mrb[0].mxu0
    %547 = vdwg.mxu0
    %v548 = vadd.f32 %v545, %v142
    %v549 = vxor.u32 %v548, 2147483648
    %v550 = vmul.f32 %v549, 1.442695
    %v551 = vpow.pop %v550
    %v552 = vadd.f32 %v551, 1.0
    %v553 = vrcp.pop %v552
    %v554 = vmul.f32 1.0, %v553
    %556 = vrot.lane.b32.xlu0 %v545, 64
    %v557 = vpop.permute.xlu0 %556
    %v559 = vmul.f32 %v554, %v557
    %561 = vrot.lane.b32.xlu0 %v559, 64
    %v562 = vpop.permute.xlu0 %561
    %v564 = vadd.f32 %v142, %v562
    %v565 = vtanh.pop %v564
    %566 = vrot.lane.b32.xlu0 %v472, 32
    %v567 = vpop.permute.xlu0 %566
    %v569 = vsub.f32 %v565, %v567
    %571 = vrot.lane.b32.xlu0 %v569, 96
    %v572 = vpop.permute.xlu0 %571
    %v574 = vmul.f32 %v554, %v572
    %v575 = vadd.f32 %v472, %v574
    %577 = vrot.lane.b32.xlu0 %v575, 96
    %v578 = vpop.permute.xlu0 %577
    %v579 = vsel %vm169, %v578, 0
    %581 = vmatprep.subr.mxu0 0.0
    %582 = vmatpush1.msra.mxu0 %v165
    %583 = vmatprep.subr.mxu0 0.0
    %584 = vmatpush1.msra.mxu0 %v166
    %585 = vmatprep.subr.mxu0 0.0
    %586 = vmatpush1.msra.mxu0 %v167
    %587 = vmatprep.subr.mxu0 0.0
    %588 = vmatpush1.msra.mxu0 %v168
    %589 = vmatprep.subr.mxu0 0.0
    %590 = vmatpush1.msra.mxu0 0.0
    %591 = vmatprep.subr.mxu0 0.0
    %592 = vmatpush1.msra.mxu0 0.0
    %593 = vmatprep.subr.mxu0 0.0
    %594 = vmatpush1.msra.mxu0 0.0
    %595 = vmatprep.subr.mxu0 0.0
    %596 = vmatpush1.msra.mxu0 0.0
    %597 = vmatprep.subr.mxu0 0.0
    %598 = vmatpush1.msra.mxu0 0.0
    %599 = vmatprep.subr.mxu0 0.0
    %600 = vmatpush1.msra.mxu0 0.0
    %601 = vmatprep.subr.mxu0 0.0
    %602 = vmatpush1.msra.mxu0 0.0
    %603 = vmatprep.subr.mxu0 0.0
    %604 = vmatpush1.msra.mxu0 0.0
    %605 = vmatprep.subr.mxu0 0.0
    %606 = vmatpush1.msra.mxu0 0.0
    %607 = vmatprep.subr.mxu0 0.0
    %608 = vmatpush1.msra.mxu0 0.0
    %609 = vmatprep.subr.mxu0 0.0
    %610 = vmatpush1.msra.mxu0 0.0
    %611 = vmatprep.subr.mxu0 0.0
    %612 = vmatpush1.msra.mxu0 0.0
    %613 = vmatprep.subr.mxu0 0.0
    %614 = vmatpush1.msra.mxu0 0.0
    %615 = vmatprep.subr.mxu0 0.0
    %616 = vmatpush1.msra.mxu0 0.0
    %617 = vmatprep.subr.mxu0 0.0
    %618 = vmatpush1.msra.mxu0 0.0
    %619 = vmatprep.subr.mxu0 0.0
    %620 = vmatpush1.msra.mxu0 0.0
    %621 = vmatprep.subr.mxu0 0.0
    %622 = vmatpush1.msra.mxu0 0.0
    %623 = vmatprep.subr.mxu0 0.0
    %624 = vmatpush1.msra.mxu0 0.0
    %625 = vmatprep.subr.mxu0 0.0
    %626 = vmatpush1.msra.mxu0 0.0
    %627 = vmatprep.subr.mxu0 0.0
    %628 = vmatpush1.msra.mxu0 0.0
    %629 = vmatprep.subr.mxu0 0.0
    %630 = vmatpush1.msra.mxu0 0.0
    %631 = vmatprep.subr.mxu0 0.0
    %632 = vmatpush1.msra.mxu0 0.0
    %633 = vmatprep.subr.mxu0 0.0
    %634 = vmatpush1.msra.mxu0 0.0
    %635 = vmatprep.subr.mxu0 0.0
    %636 = vmatpush1.msra.mxu0 0.0
    %637 = vmatprep.subr.mxu0 0.0
    %638 = vmatpush1.msra.mxu0 0.0
    %639 = vmatprep.subr.mxu0 0.0
    %640 = vmatpush1.msra.mxu0 0.0
    %641 = vmatprep.subr.mxu0 0.0
    %642 = vmatpush1.msra.mxu0 0.0
    %643 = vmatprep.subr.mxu0 0.0
    %644 = vmatpush1.msra.mxu0 0.0
    %645 = vmatprep.mubr.f32.mxu0 0.0
    %646 = vmatmul.mubr.f32.gmra.mrb[0].mxu0 %v579
    %v647 = vpop.f32.mrb[0].mxu0
    %v648 = vadd.f32 0.0, %v647
    %v649 = vpop.f32.mrb[0].mxu0
    %650 = vdwg.mxu0
    %v651 = vadd.f32 %v648, %v147
    %v652 = vxor.u32 %v651, 2147483648
    %v653 = vmul.f32 %v652, 1.442695
    %v654 = vpow.pop %v653
    %v655 = vadd.f32 %v654, 1.0
    %v656 = vrcp.pop %v655
    %v657 = vmul.f32 1.0, %v656
    %659 = vrot.lane.b32.xlu0 %v648, 64
    %v660 = vpop.permute.xlu0 %659
    %v662 = vmul.f32 %v657, %v660
    %664 = vrot.lane.b32.xlu0 %v662, 64
    %v665 = vpop.permute.xlu0 %664
    %v667 = vadd.f32 %v147, %v665
    %v668 = vtanh.pop %v667
    %669 = vrot.lane.b32.xlu0 %v575, 32
    %v670 = vpop.permute.xlu0 %669
    %v672 = vsub.f32 %v668, %v670
    %674 = vrot.lane.b32.xlu0 %v672, 96
    %v675 = vpop.permute.xlu0 %674
    %v677 = vmul.f32 %v657, %v675
    %v678 = vadd.f32 %v575, %v677
    %680 = vrot.lane.b32.xlu0 %v678, 96
    %v681 = vpop.permute.xlu0 %680
    %v682 = vsel %vm169, %v681, 0
    %684 = vmatprep.subr.mxu0 0.0
    %685 = vmatpush1.msra.mxu0 %v165
    %686 = vmatprep.subr.mxu0 0.0
    %687 = vmatpush1.msra.mxu0 %v166
    %688 = vmatprep.subr.mxu0 0.0
    %689 = vmatpush1.msra.mxu0 %v167
    %690 = vmatprep.subr.mxu0 0.0
    %691 = vmatpush1.msra.mxu0 %v168
    %692 = vmatprep.subr.mxu0 0.0
    %693 = vmatpush1.msra.mxu0 0.0
    %694 = vmatprep.subr.mxu0 0.0
    %695 = vmatpush1.msra.mxu0 0.0
    %696 = vmatprep.subr.mxu0 0.0
    %697 = vmatpush1.msra.mxu0 0.0
    %698 = vmatprep.subr.mxu0 0.0
    %699 = vmatpush1.msra.mxu0 0.0
    %700 = vmatprep.subr.mxu0 0.0
    %701 = vmatpush1.msra.mxu0 0.0
    %702 = vmatprep.subr.mxu0 0.0
    %703 = vmatpush1.msra.mxu0 0.0
    %704 = vmatprep.subr.mxu0 0.0
    %705 = vmatpush1.msra.mxu0 0.0
    %706 = vmatprep.subr.mxu0 0.0
    %707 = vmatpush1.msra.mxu0 0.0
    %708 = vmatprep.subr.mxu0 0.0
    %709 = vmatpush1.msra.mxu0 0.0
    %710 = vmatprep.subr.mxu0 0.0
    %711 = vmatpush1.msra.mxu0 0.0
    %712 = vmatprep.subr.mxu0 0.0
    %713 = vmatpush1.msra.mxu0 0.0
    %714 = vmatprep.subr.mxu0 0.0
    %715 = vmatpush1.msra.mxu0 0.0
    %716 = vmatprep.subr.mxu0 0.0
    %717 = vmatpush1.msra.mxu0 0.0
    %718 = vmatprep.subr.mxu0 0.0
    %719 = vmatpush1.msra.mxu0 0.0
    %720 = vmatprep.subr.mxu0 0.0
    %721 = vmatpush1.msra.mxu0 0.0
    %722 = vmatprep.subr.mxu0 0.0
    %723 = vmatpush1.msra.mxu0 0.0
    %724 = vmatprep.subr.mxu0 0.0
    %725 = vmatpush1.msra.mxu0 0.0
    %726 = vmatprep.subr.mxu0 0.0
    %727 = vmatpush1.msra.mxu0 0.0
    %728 = vmatprep.subr.mxu0 0.0
    %729 = vmatpush1.msra.mxu0 0.0
    %730 = vmatprep.subr.mxu0 0.0
    %731 = vmatpush1.msra.mxu0 0.0
    %732 = vmatprep.subr.mxu0 0.0
    %733 = vmatpush1.msra.mxu0 0.0
    %734 = vmatprep.subr.mxu0 0.0
    %735 = vmatpush1.msra.mxu0 0.0
    %736 = vmatprep.subr.mxu0 0.0
    %737 = vmatpush1.msra.mxu0 0.0
    %738 = vmatprep.subr.mxu0 0.0
    %739 = vmatpush1.msra.mxu0 0.0
    %740 = vmatprep.subr.mxu0 0.0
    %741 = vmatpush1.msra.mxu0 0.0
    %742 = vmatprep.subr.mxu0 0.0
    %743 = vmatpush1.msra.mxu0 0.0
    %744 = vmatprep.subr.mxu0 0.0
    %745 = vmatpush1.msra.mxu0 0.0
    %746 = vmatprep.subr.mxu0 0.0
    %747 = vmatpush1.msra.mxu0 0.0
    %748 = vmatprep.mubr.f32.mxu0 0.0
    %749 = vmatmul.mubr.f32.gmra.mrb[0].mxu0 %v682
    %v750 = vpop.f32.mrb[0].mxu0
    %v751 = vadd.f32 0.0, %v750
    %v752 = vpop.f32.mrb[0].mxu0
    %753 = vdwg.mxu0
    %v754 = vadd.f32 %v751, %v152
    %v755 = vxor.u32 %v754, 2147483648
    %v756 = vmul.f32 %v755, 1.442695
    %v757 = vpow.pop %v756
    %v758 = vadd.f32 %v757, 1.0
    %v759 = vrcp.pop %v758
    %v760 = vmul.f32 1.0, %v759
    %762 = vrot.lane.b32.xlu0 %v751, 64
    %v763 = vpop.permute.xlu0 %762
    %v765 = vmul.f32 %v760, %v763
    %767 = vrot.lane.b32.xlu0 %v765, 64
    %v768 = vpop.permute.xlu0 %767
    %v770 = vadd.f32 %v152, %v768
    %v771 = vtanh.pop %v770
    %772 = vrot.lane.b32.xlu0 %v678, 32
    %v773 = vpop.permute.xlu0 %772
    %v775 = vsub.f32 %v771, %v773
    %777 = vrot.lane.b32.xlu0 %v775, 96
    %v778 = vpop.permute.xlu0 %777
    %v780 = vmul.f32 %v760, %v778
    %v781 = vadd.f32 %v678, %v780
    %783 = vrot.lane.b32.xlu0 %v781, 96
    %v784 = vpop.permute.xlu0 %783
    %v785 = vsel %vm169, %v784, 0
    %787 = vmatprep.subr.mxu0 0.0
    %788 = vmatpush1.msra.mxu0 %v165
    %789 = vmatprep.subr.mxu0 0.0
    %790 = vmatpush1.msra.mxu0 %v166
    %791 = vmatprep.subr.mxu0 0.0
    %792 = vmatpush1.msra.mxu0 %v167
    %793 = vmatprep.subr.mxu0 0.0
    %794 = vmatpush1.msra.mxu0 %v168
    %795 = vmatprep.subr.mxu0 0.0
    %796 = vmatpush1.msra.mxu0 0.0
    %797 = vmatprep.subr.mxu0 0.0
    %798 = vmatpush1.msra.mxu0 0.0
    %799 = vmatprep.subr.mxu0 0.0
    %800 = vmatpush1.msra.mxu0 0.0
    %801 = vmatprep.subr.mxu0 0.0
    %802 = vmatpush1.msra.mxu0 0.0
    %803 = vmatprep.subr.mxu0 0.0
    %804 = vmatpush1.msra.mxu0 0.0
    %805 = vmatprep.subr.mxu0 0.0
    %806 = vmatpush1.msra.mxu0 0.0
    %807 = vmatprep.subr.mxu0 0.0
    %808 = vmatpush1.msra.mxu0 0.0
    %809 = vmatprep.subr.mxu0 0.0
    %810 = vmatpush1.msra.mxu0 0.0
    %811 = vmatprep.subr.mxu0 0.0
    %812 = vmatpush1.msra.mxu0 0.0
    %813 = vmatprep.subr.mxu0 0.0
    %814 = vmatpush1.msra.mxu0 0.0
    %815 = vmatprep.subr.mxu0 0.0
    %816 = vmatpush1.msra.mxu0 0.0
    %817 = vmatprep.subr.mxu0 0.0
    %818 = vmatpush1.msra.mxu0 0.0
    %819 = vmatprep.subr.mxu0 0.0
    %820 = vmatpush1.msra.mxu0 0.0
    %821 = vmatprep.subr.mxu0 0.0
    %822 = vmatpush1.msra.mxu0 0.0
    %823 = vmatprep.subr.mxu0 0.0
    %824 = vmatpush1.msra.mxu0 0.0
    %825 = vmatprep.subr.mxu0 0.0
    %826 = vmatpush1.msra.mxu0 0.0
    %827 = vmatprep.subr.mxu0 0.0
    %828 = vmatpush1.msra.mxu0 0.0
    %829 = vmatprep.subr.mxu0 0.0
    %830 = vmatpush1.msra.mxu0 0.0
    %831 = vmatprep.subr.mxu0 0.0
    %832 = vmatpush1.msra.mxu0 0.0
    %833 = vmatprep.subr.mxu0 0.0
    %834 = vmatpush1.msra.mxu0 0.0
    %835 = vmatprep.subr.mxu0 0.0
    %836 = vmatpush1.msra.mxu0 0.0
    %837 = vmatprep.subr.mxu0 0.0
    %838 = vmatpush1.msra.mxu0 0.0
    %839 = vmatprep.subr.mxu0 0.0
    %840 = vmatpush1.msra.mxu0 0.0
    %841 = vmatprep.subr.mxu0 0.0
    %842 = vmatpush1.msra.mxu0 0.0
    %843 = vmatprep.subr.mxu0 0.0
    %844 = vmatpush1.msra.mxu0 0.0
    %845 = vmatprep.subr.mxu0 0.0
    %846 = vmatpush1.msra.mxu0 0.0
    %847 = vmatprep.subr.mxu0 0.0
    %848 = vmatpush1.msra.mxu0 0.0
    %849 = vmatprep.subr.mxu0 0.0
    %850 = vmatpush1.msra.mxu0 0.0
    %851 = vmatprep.mubr.f32.mxu0 0.0
    %852 = vmatmul.mubr.f32.gmra.mrb[0].mxu0 %v785
    %v853 = vpop.f32.mrb[0].mxu0
    %v854 = vadd.f32 0.0, %v853
    %v855 = vpop.f32.mrb[0].mxu0
    %856 = vdwg.mxu0
    %v857 = vadd.f32 %v854, %v157
    %v858 = vxor.u32 %v857, 2147483648
    %v859 = vmul.f32 %v858, 1.442695
    %v860 = vpow.pop %v859
    %v861 = vadd.f32 %v860, 1.0
    %v862 = vrcp.pop %v861
    %v863 = vmul.f32 1.0, %v862
    %865 = vrot.lane.b32.xlu0 %v854, 64
    %v866 = vpop.permute.xlu0 %865
    %v868 = vmul.f32 %v863, %v866
    %870 = vrot.lane.b32.xlu0 %v868, 64
    %v871 = vpop.permute.xlu0 %870
    %v873 = vadd.f32 %v157, %v871
    %v874 = vtanh.pop %v873
    %875 = vrot.lane.b32.xlu0 %v781, 32
    %v876 = vpop.permute.xlu0 %875
    %v878 = vsub.f32 %v874, %v876
    %880 = vrot.lane.b32.xlu0 %v878, 96
    %v881 = vpop.permute.xlu0 %880
    %v883 = vmul.f32 %v863, %v881
    %v884 = vadd.f32 %v781, %v883
    %886 = vrot.lane.b32.xlu0 %v884, 96
    %v887 = vpop.permute.xlu0 %886
    %v888 = vsel %vm169, %v887, 0
    %890 = vmatprep.subr.mxu0 0.0
    %891 = vmatpush1.msra.mxu0 %v165
    %892 = vmatprep.subr.mxu0 0.0
    %893 = vmatpush1.msra.mxu0 %v166
    %894 = vmatprep.subr.mxu0 0.0
    %895 = vmatpush1.msra.mxu0 %v167
    %896 = vmatprep.subr.mxu0 0.0
    %897 = vmatpush1.msra.mxu0 %v168
    %898 = vmatprep.subr.mxu0 0.0
    %899 = vmatpush1.msra.mxu0 0.0
    %900 = vmatprep.subr.mxu0 0.0
    %901 = vmatpush1.msra.mxu0 0.0
    %902 = vmatprep.subr.mxu0 0.0
    %903 = vmatpush1.msra.mxu0 0.0
    %904 = vmatprep.subr.mxu0 0.0
    %905 = vmatpush1.msra.mxu0 0.0
    %906 = vmatprep.subr.mxu0 0.0
    %907 = vmatpush1.msra.mxu0 0.0
    %908 = vmatprep.subr.mxu0 0.0
    %909 = vmatpush1.msra.mxu0 0.0
    %910 = vmatprep.subr.mxu0 0.0
    %911 = vmatpush1.msra.mxu0 0.0
    %912 = vmatprep.subr.mxu0 0.0
    %913 = vmatpush1.msra.mxu0 0.0
    %914 = vmatprep.subr.mxu0 0.0
    %915 = vmatpush1.msra.mxu0 0.0
    %916 = vmatprep.subr.mxu0 0.0
    %917 = vmatpush1.msra.mxu0 0.0
    %918 = vmatprep.subr.mxu0 0.0
    %919 = vmatpush1.msra.mxu0 0.0
    %920 = vmatprep.subr.mxu0 0.0
    %921 = vmatpush1.msra.mxu0 0.0
    %922 = vmatprep.subr.mxu0 0.0
    %923 = vmatpush1.msra.mxu0 0.0
    %924 = vmatprep.subr.mxu0 0.0
    %925 = vmatpush1.msra.mxu0 0.0
    %926 = vmatprep.subr.mxu0 0.0
    %927 = vmatpush1.msra.mxu0 0.0
    %928 = vmatprep.subr.mxu0 0.0
    %929 = vmatpush1.msra.mxu0 0.0
    %930 = vmatprep.subr.mxu0 0.0
    %931 = vmatpush1.msra.mxu0 0.0
    %932 = vmatprep.subr.mxu0 0.0
    %933 = vmatpush1.msra.mxu0 0.0
    %934 = vmatprep.subr.mxu0 0.0
    %935 = vmatpush1.msra.mxu0 0.0
    %936 = vmatprep.subr.mxu0 0.0
    %937 = vmatpush1.msra.mxu0 0.0
    %938 = vmatprep.subr.mxu0 0.0
    %939 = vmatpush1.msra.mxu0 0.0
    %940 = vmatprep.subr.mxu0 0.0
    %941 = vmatpush1.msra.mxu0 0.0
    %942 = vmatprep.subr.mxu0 0.0
    %943 = vmatpush1.msra.mxu0 0.0
    %944 = vmatprep.subr.mxu0 0.0
    %945 = vmatpush1.msra.mxu0 0.0
    %946 = vmatprep.subr.mxu0 0.0
    %947 = vmatpush1.msra.mxu0 0.0
    %948 = vmatprep.subr.mxu0 0.0
    %949 = vmatpush1.msra.mxu0 0.0
    %950 = vmatprep.subr.mxu0 0.0
    %951 = vmatpush1.msra.mxu0 0.0
    %952 = vmatprep.subr.mxu0 0.0
    %953 = vmatpush1.msra.mxu0 0.0
    %954 = vmatprep.mubr.f32.mxu0 0.0
    %955 = vmatmul.mubr.f32.gmra.mrb[0].mxu0 %v888
    %v956 = vpop.f32.mrb[0].mxu0
    %v957 = vadd.f32 0.0, %v956
    %v958 = vpop.f32.mrb[0].mxu0
    %959 = vdwg.mxu0
    %v960 = vadd.f32 %v957, %v162
    %v961 = vxor.u32 %v960, 2147483648
    %v962 = vmul.f32 %v961, 1.442695
    %v963 = vpow.pop %v962
    %v964 = vadd.f32 %v963, 1.0
    %v965 = vrcp.pop %v964
    %v966 = vmul.f32 1.0, %v965
    %968 = vrot.lane.b32.xlu0 %v957, 64
    %v969 = vpop.permute.xlu0 %968
    %v971 = vmul.f32 %v966, %v969
    %973 = vrot.lane.b32.xlu0 %v971, 64
    %v974 = vpop.permute.xlu0 %973
    %v976 = vadd.f32 %v162, %v974
    %v977 = vtanh.pop %v976
    %978 = vrot.lane.b32.xlu0 %v884, 32
    %v979 = vpop.permute.xlu0 %978
    %v981 = vsub.f32 %v977, %v979
    %983 = vrot.lane.b32.xlu0 %v981, 96
    %v984 = vpop.permute.xlu0 %983
    %v986 = vmul.f32 %v966, %v984
    %v987 = vadd.f32 %v884, %v986
    %989 = vrot.lane.b32.xlu0 %v987, 96
    %v990 = vpop.permute.xlu0 %989
    %992 = vst.msk [vmem:[#allocation2] sm:$0xff] %vm169, %v990
    // Predicated region
    $region18: #{tpu_custom_call.1} parent=1 // pred_check
      _
    $region19: #{tpu_custom_call.1} parent=1 // pred_check_branch
      %994 = sbr.rel (0) target = $region21
    $region20: #{tpu_custom_call.1} parent=1 // pred_region
      %s996 = ssub.s32 128, 128
      %997 = vsyncadd [#allocation3], %s996
      %s999 = sshll.u32 [#allocation2], 4
      %s1000 = int_to_ptr.vmem [resolvable:$true] %s999
      %1002 = dma.vmem_to_hbm [thread:$0]  %s1000, 128, %s4, [#allocation3]
    $region21: #{tpu_custom_call.1} parent=1 // pred_fallthru
      _
    // Predicated region
    $region22: #{tpu_custom_call.1} parent=1 // pred_check
      _
    $region23: #{tpu_custom_call.1} parent=1 // pred_check_branch
      %1004 = sbr.rel (0) target = $region25
    $region24: #{tpu_custom_call.1} parent=1 // pred_region
      %1005 = dma.done [#allocation3], 128
    $region25: #{tpu_custom_call.1} parent=1 // pred_fallthru
      _
    %1006 = vsyncpa [#allocation3], 1

</llo_original>
